<compile_context>
chip_gen: v5e
topology: v5e:2x2
jax: 0.10.0
libtpu: 0.0.40
codegen_flags: <defaults>
</compile_context>

<pallas_src>
import functools

import jax
import jax.numpy as jnp
from jax import lax
from jax.experimental import pallas as pl
from jax.experimental.pallas import tpu as pltpu

# ---------------------------------------------------------------------------
# Tiling policy
# ---------------------------------------------------------------------------
MAX_TM = 1024                        # batch-tile cap (sublane quantum 8)
MAX_TN = 512                         # output-feature-tile cap (lane quantum 128, MXU friendly)
VMEM_TILE_BUDGET = 40 * 1024 * 1024  # v7x-safe working-set cap (64 MiB physical VMEM per TC)
VMEM_LIMIT_BYTES = 48 * 1024 * 1024  # scoped-VMEM limit handed to Mosaic (< v7x physical)
FULL_K_LIMIT = 16384                 # up to this D_in the whole contraction dim is one K tile
K_SPLIT = 512                        # K-tile quantum only for very large D_in


def _round_up(n: int, m: int) -> int:
    return ((n + m - 1) // m) * m


def _divisor_tile(total: int, cap: int, quantum: int) -> int:
    """Largest multiple of `quantum` that divides `total` and is <= max(cap, quantum)."""
    cap = max(cap, quantum)
    best = quantum
    t = quantum
    while t <= min(total, cap):
        if total % t == 0:
            best = t
        t += quantum
    return best


def _vmem_bytes(tm, tn, tk, x_bytes, w_bytes):
    # double-buffered x / W input tiles + double-buffered f32 output tile + bias tile
    return 2 * (tm * tk * x_bytes + tk * tn * w_bytes + tn * 4) + 2 * tm * tn * 4


def _plan_tiles(b_rows, d_in_p, d_out_p, x_bytes, w_bytes):
    """Pick (tm, tn, tk): full-K, as-large-as-fits M/N tiles, >=2 blocks on a parallel axis."""
    tk = d_in_p if d_in_p <= FULL_K_LIMIT else K_SPLIT
    tn = _divisor_tile(d_out_p, MAX_TN, 128)
    tm = _divisor_tile(b_rows, MAX_TM, 8)
    # Keep at least 2 blocks along a "parallel" axis so v7x's second TensorCore has work
    # (no cost on single-TC v5e/v6e).
    if b_rows // tm == 1 and d_out_p // tn == 1 and b_rows >= 16:
        tm = _divisor_tile(b_rows, b_rows // 2, 8)
    # Shrink until the double-buffered working set fits the (v7x-safe) VMEM budget.
    while _vmem_bytes(tm, tn, tk, x_bytes, w_bytes) > VMEM_TILE_BUDGET:
        if tm > 256 and tm >= tn:
            tm = _divisor_tile(b_rows, tm // 2, 8)
        elif tn > 128:
            tn = _divisor_tile(d_out_p, tn // 2, 128)
        elif tm > 8:
            tm = _divisor_tile(b_rows, tm // 2, 8)
        elif tk > 128 and tk % 128 == 0 and d_in_p % 128 == 0:
            tk = _divisor_tile(d_in_p, tk // 2, 128)   # last resort: split the K axis
        else:
            break
    return tm, tn, tk


# ---------------------------------------------------------------------------
# Parameter prep (one-time, at init -- NOT per forward call)
# ---------------------------------------------------------------------------
def prepare_params(weight, bias, compute_dtype=jnp.bfloat16):
    """weight: (D_out, D_in) nn.Linear layout; bias: (D_out,).

    Returns (w_t_padded, bias_padded, d_out):
      w_t_padded : (D_in_p, D_out_p) = weight.T, cast to `compute_dtype`, zero-padded so
                   D_in_p is a multiple of 8 (sublane) and D_out_p a multiple of 128 (lane).
      bias_padded: (1, D_out_p) f32.
    Use compute_dtype=jnp.float32 for exact f32 numerics; bf16 halves weight HBM bytes in
    this HBM-bound kernel while MXU accumulation stays f32.
    """
    d_out, d_in = weight.shape
    if d_in <= FULL_K_LIMIT:
        d_in_p = _round_up(d_in, 8)
    else:  # huge D_in: pad so it splits cleanly into lane-aligned K tiles
        d_in_p = _round_up(d_in, K_SPLIT)
    d_out_p = _round_up(d_out, 128)
    w_t = (jnp.zeros((d_in_p, d_out_p), compute_dtype)
           .at[:d_in, :d_out].set(weight.T.astype(compute_dtype)))
    b = (jnp.zeros((1, d_out_p), jnp.float32)
         .at[0, :d_out].set(bias.astype(jnp.float32)))
    return w_t, b, d_out


# ---------------------------------------------------------------------------
# Kernel: o_tile = x_tile @ w_tile (+ bias once); accumulates in the resident f32 o_ref
# ---------------------------------------------------------------------------
def _linear_kernel(x_ref, w_ref, b_ref, o_ref):
    k = pl.program_id(2)
    # Cast the x tile to the weight dtype on the VPU (no extra HBM pass); MXU accumulates f32.
    part = jnp.dot(x_ref[...].astype(w_ref.dtype), w_ref[...],
                   preferred_element_type=jnp.float32)

    @pl.when(k == 0)
    def _first():
        o_ref[...] = b_ref[...] + part          # bias added exactly once per output tile

    @pl.when(k > 0)
    def _rest():                                # only live when the K grid axis survives
        o_ref[...] += part


@functools.partial(jax.jit, static_argnames=("d_out",))
def softmax_classifier_forward(x, w_t_p, b_p, d_out):
    """x: (B, D_in) f32; w_t_p/b_p from prepare_params(). Returns f32 logits (B, d_out)."""
    B, d_in = x.shape
    d_in_p, d_out_p = w_t_p.shape
    b_rows = _round_up(B, 8)

    # Pad x only when the logical shape actually requires it (no copy in the common case).
    if (b_rows, d_in_p) != (B, d_in):
        x = jnp.zeros((b_rows, d_in_p), x.dtype).at[:B, :d_in].set(x)

    tm, tn, tk = _plan_tiles(b_rows, d_in_p, d_out_p,
                             x.dtype.itemsize, w_t_p.dtype.itemsize)
    grid = (b_rows // tm, d_out_p // tn, d_in_p // tk)
    n_i, n_j, n_k = grid

    cost = pl.CostEstimate(
        flops=2 * b_rows * d_in_p * d_out_p,
        transcendentals=0,
        bytes_accessed=(n_j * b_rows * d_in_p * x.dtype.itemsize        # x re-read per N tile
                        + n_i * d_in_p * d_out_p * w_t_p.dtype.itemsize  # W re-read per M tile
                        + n_i * n_k * d_out_p * 4                        # bias
                        + b_rows * d_out_p * 4),                         # output
    )

    out_p = pl.pallas_call(
        _linear_kernel,
        out_shape=jax.ShapeDtypeStruct((b_rows, d_out_p), jnp.float32),
        grid_spec=pltpu.PrefetchScalarGridSpec(
            num_scalar_prefetch=0,
            grid=grid,
            in_specs=[
                pl.BlockSpec((tm, tk), lambda i, j, k: (i, k)),
                pl.BlockSpec((tk, tn), lambda i, j, k: (k, j)),
                pl.BlockSpec((1, tn), lambda i, j, k: (0, j)),
            ],
            out_specs=pl.BlockSpec((tm, tn), lambda i, j, k: (i, j)),
        ),
        compiler_params=pltpu.CompilerParams(
            dimension_semantics=("parallel", "parallel", "arbitrary"),
            vmem_limit_bytes=VMEM_LIMIT_BYTES,
        ),
        cost_estimate=cost,
    )(x, w_t_p, b_p)

    # Slice away padding only if any was added (no extra HBM copy in the aligned case).
    if (b_rows, d_out_p) != (B, d_out):
        out_p = out_p[:B, :d_out]
    return out_p


if __name__ == "__main__":
    # Iris-style shapes: 4 input features, 3 classes, small batch.
    batch, input_dim, output_dim = 8, 4, 3

    key = jax.random.PRNGKey(0)
    kx, kw, kb = jax.random.split(key, 3)

    # nn.Linear-style init: U[-1/sqrt(in), 1/sqrt(in)]
    bound = 1.0 / (input_dim ** 0.5)
    weight = jax.random.uniform(kw, (output_dim, input_dim), jnp.float32, -bound, bound)
    bias = jax.random.uniform(kb, (output_dim,), jnp.float32, -bound, bound)
    x = jax.random.normal(kx, (batch, input_dim), jnp.float32)

    # One-time param prep (transpose + pad + bf16 cast) outside the per-call path.
    w_t_p, b_p, d_out = prepare_params(weight, bias)
    out = softmax_classifier_forward(x, w_t_p, b_p, d_out)
    jax.block_until_ready(out)

    assert out.shape == (batch, output_dim)
    # Reference at matching precision (bf16 inputs, f32 accumulation).
    ref = jnp.dot(x.astype(jnp.bfloat16), weight.T.astype(jnp.bfloat16),
                  preferred_element_type=jnp.float32) + bias
    assert jnp.allclose(out, ref, atol=1e-5, rtol=1e-5), "mismatch vs bf16 reference (small)"
    assert jnp.allclose(out, x @ weight.T + bias, atol=5e-2, rtol=5e-2), \
        "mismatch vs f32 reference (small)"

    # Secondary check: multi-tile (M-parallel) grid path with bf16 weights.
    B2, D_in2, D_out2 = 256, 1024, 384
    k1, k2, k3 = jax.random.split(jax.random.PRNGKey(1), 3)
    w2 = jax.random.normal(k1, (D_out2, D_in2), jnp.float32) * 0.02
    b2 = jax.random.normal(k2, (D_out2,), jnp.float32) * 0.02
    x2 = jax.random.normal(k3, (B2, D_in2), jnp.float32)
    w2_t_p, b2_p, d_out2 = prepare_params(w2, b2)
    out2 = softmax_classifier_forward(x2, w2_t_p, b2_p, d_out2)
    jax.block_until_ready(out2)
    ref2 = jnp.dot(x2.astype(jnp.bfloat16), w2.T.astype(jnp.bfloat16),
                   preferred_element_type=jnp.float32) + b2
    assert out2.shape == (B2, D_out2)
    assert jnp.allclose(out2, ref2, atol=1e-3, rtol=1e-3), "mismatch vs bf16 reference (tiled)"

    # Exact-f32 option (compute_dtype=jnp.float32) still matches the f32 reference.
    w3_t_p, b3_p, d_out3 = prepare_params(w2, b2, compute_dtype=jnp.float32)
    out3 = softmax_classifier_forward(x2, w3_t_p, b3_p, d_out3)
    jax.block_until_ready(out3)
    ref3 = jnp.dot(x2, w2.T, precision=lax.Precision.HIGHEST) + b2
    assert jnp.allclose(out3, ref3, atol=2e-3, rtol=1e-3), "mismatch vs f32 reference (tiled)"

    # TODO(synk): the PyTorch forward() returns raw logits (softmax lives in the loss), so no
    # softmax epilogue is fused; it could be added at the last-K step if probabilities are needed.
    print("KERNEL_OK")
</pallas_src>

<mosaic_0001>
module attributes {stable_mosaic.version = 11 : i64} {
  func.func @_linear_kernel(%arg0: i32, %arg1: i32, %arg2: i32, %arg3: memref<8x8xf32, #tpu.memory_space<vmem>>, %arg4: memref<8x128xbf16, #tpu.memory_space<vmem>>, %arg5: memref<1x128xf32, #tpu.memory_space<vmem>>, %arg6: memref<8x128xf32, #tpu.memory_space<vmem>>) attributes {dimension_semantics = [#tpu.dimension_semantics<parallel>, #tpu.dimension_semantics<parallel>, #tpu.dimension_semantics<arbitrary>], iteration_bounds = array<i64: 1, 1, 1>, scalar_prefetch = 0 : i64, scratch_operands = 0 : i64, tpu.core_type = #tpu.core_type<tc>, window_params = [{transform_indices = @transform_0, window_bounds = array<i64: 8, 8>}, {transform_indices = @transform_1, window_bounds = array<i64: 8, 128>}, {transform_indices = @transform_2, window_bounds = array<i64: 1, 128>}, {transform_indices = @transform_3, window_bounds = array<i64: 8, 128>}]} {
    %c0 = arith.constant 0 : index
    %c0_0 = arith.constant 0 : index
    %0 = vector.load %arg3[%c0, %c0_0] : memref<8x8xf32, #tpu.memory_space<vmem>>, vector<8x8xf32>
    %1 = arith.truncf %0 : vector<8x8xf32> to vector<8x8xbf16>
    %c0_1 = arith.constant 0 : index
    %c0_2 = arith.constant 0 : index
    %2 = vector.load %arg4[%c0_1, %c0_2] : memref<8x128xbf16, #tpu.memory_space<vmem>>, vector<8x128xbf16>
    %cst = arith.constant dense<0.000000e+00> : vector<8x128xf32>
    %3 = tpu.matmul %1, %2, %cst {dimension_numbers = #tpu.dot_dimension_numbers<[1], [0], [0], [1], [0, 0, 1, 1], [], []>} : vector<8x8xbf16>, vector<8x128xbf16>, vector<8x128xf32> -> vector<8x128xf32>
    %c0_i32 = arith.constant 0 : i32
    %4 = arith.cmpi eq, %arg2, %c0_i32 : i32
    %5 = arith.extui %4 : i1 to i32
    %c0_i32_3 = arith.constant 0 : i32
    %6 = arith.cmpi ne, %5, %c0_i32_3 : i32
    scf.if %6 {
      %c0_6 = arith.constant 0 : index
      %c0_7 = arith.constant 0 : index
      %10 = vector.load %arg5[%c0_6, %c0_7] : memref<1x128xf32, #tpu.memory_space<vmem>>, vector<1x128xf32>
      %11 = vector.broadcast %10 : vector<1x128xf32> to vector<8x128xf32>
      %12 = arith.addf %11, %3 : vector<8x128xf32>
      %c0_8 = arith.constant 0 : index
      %c0_9 = arith.constant 0 : index
      %13 = vector.load %arg6[%c0_8, %c0_9] : memref<8x128xf32, #tpu.memory_space<vmem>>, vector<8x128xf32>
      tpu.vector_store %arg6[%c0_8, %c0_9], %12 {strides = array<i32>} : memref<8x128xf32, #tpu.memory_space<vmem>>, vector<8x128xf32>,
    } else {
    }
    %c0_i32_4 = arith.constant 0 : i32
    %7 = arith.cmpi sgt, %arg2, %c0_i32_4 : i32
    %8 = arith.extui %7 : i1 to i32
    %c0_i32_5 = arith.constant 0 : i32
    %9 = arith.cmpi ne, %8, %c0_i32_5 : i32
    scf.if %9 {
      %c0_6 = arith.constant 0 : index
      %c0_7 = arith.constant 0 : index
      %10 = vector.load %arg6[%c0_6, %c0_7] : memref<8x128xf32, #tpu.memory_space<vmem>>, vector<8x128xf32>
      %11 = arith.addf %10, %3 : vector<8x128xf32>
      %c0_8 = arith.constant 0 : index
      %c0_9 = arith.constant 0 : index
      %12 = vector.load %arg6[%c0_8, %c0_9] : memref<8x128xf32, #tpu.memory_space<vmem>>, vector<8x128xf32>
      tpu.vector_store %arg6[%c0_8, %c0_9], %11 {strides = array<i32>} : memref<8x128xf32, #tpu.memory_space<vmem>>, vector<8x128xf32>,
    } else {
    }
    return
  }
  func.func @transform_0(%arg0: i32, %arg1: i32, %arg2: i32) -> (i32, i32) {
    %c0_i32 = arith.constant 0 : i32
    return %arg0, %arg2 : i32, i32
  }
  func.func @transform_1(%arg0: i32, %arg1: i32, %arg2: i32) -> (i32, i32) {
    %c0_i32 = arith.constant 0 : i32
    return %arg2, %arg1 : i32, i32
  }
  func.func @transform_2(%arg0: i32, %arg1: i32, %arg2: i32) -> (i32, i32) {
    %c0_i32 = arith.constant 0 : i32
    %c0_i32_0 = arith.constant 0 : i32
    return %c0_i32, %arg1 : i32, i32
  }
  func.func @transform_3(%arg0: i32, %arg1: i32, %arg2: i32) -> (i32, i32) {
    %c0_i32 = arith.constant 0 : i32
    return %arg0, %arg1 : i32, i32
  }
}

</mosaic_0001>

<llo_original>
// kernel: softmax_classifier_forward.1
$region0: #{softmax_classifier_forward.1}
  #allocation0 [shape = 'u32[]', space=smem, size = 0x4, offset = 0x4, fixed_abs, tag = 'smem constant byte address 0x4 - core index']
  #allocation1 [shape = 'u32[72,128]{1,0:T(1,128)}', space=vmem, size = 0x9000, scoped, tag = 'internal scratch']
  %s0 = inlined_call_operand.vmem [shape: f32[8,8], index: 0, kind: input, shape index: {}]
  %s1 = inlined_call_operand.vmem [shape: bf16[8,128], index: 1, kind: input, shape index: {}]
  %s2 = inlined_call_operand.vmem [shape: f32[1,128], index: 2, kind: input, shape index: {}]
  %s3 = inlined_call_operand.vmem [shape: f32[8,128], index: 3, kind: output, shape index: {}]
  %s4 = sld [smem:[#allocation0]]
  $region30: #{softmax_classifier_forward.1} parent=0
    _
  %s6 = ssub.s32 1, %s4
  %s7 = scalar_select 0, %s6, %s4
  // Predicated region
  $region2: #{softmax_classifier_forward.1} parent=0 // pred_check
    _
  $region3: #{softmax_classifier_forward.1} parent=0 // pred_check_branch
    %9 = sbr.rel (0) target = $region5
  $region4: #{softmax_classifier_forward.1} parent=0 // pred_region
    _
  $region5: #{softmax_classifier_forward.1} parent=0 // pred_fallthru
    _
  // Predicated region
  $region6: #{softmax_classifier_forward.1} parent=0 // pred_check
    _
  $region7: #{softmax_classifier_forward.1} parent=0 // pred_check_branch
    %11 = sbr.rel (0) target = $region9
  $region8: #{softmax_classifier_forward.1} parent=0 // pred_region
    _
  $region9: #{softmax_classifier_forward.1} parent=0 // pred_fallthru
    _
  // Predicated region
  $region10: #{softmax_classifier_forward.1} parent=0 // pred_check
    _
  $region11: #{softmax_classifier_forward.1} parent=0 // pred_check_branch
    %13 = sbr.rel (0) target = $region13
  $region12: #{softmax_classifier_forward.1} parent=0 // pred_region
    _
  $region13: #{softmax_classifier_forward.1} parent=0 // pred_fallthru
    _
  %v15 = vld [vmem:[%s0] sm:$0xff]
  %v16 = vpack.c.bf16 %v15, %v15
  %v17 = vld [vmem:[%s1] sm:$0xf]
  %vm18 = vcmask 64512
  %v20 = vsel %vm18, %v16, 0
  %vm22 = vcmask 1043456
  %v24 = vsel %vm22, %v17, 0
  %26 = vmatpush.bf16.msra.mxu0 0
  %27 = vmatpush.bf16.msra.mxu0 0
  %28 = vmatpush.bf16.msra.mxu0 0
  %29 = vmatpush.bf16.msra.mxu0 0
  %30 = vmatpush.bf16.msra.mxu0 0
  %31 = vmatpush.bf16.msra.mxu0 0
  %32 = vmatpush.bf16.msra.mxu0 0
  %33 = vmatpush.bf16.msra.mxu0 %v24
  %34 = vmatmul.bf16.gmra.mxu0 %v20
  %v35 = vpop.f32.mrf.mxu0
  %v36 = vadd.f32 0.0, %v35
  %v37 = vpop.f32.mrf.mxu0
  %38 = vdwg.mxu0
  %p39 = scmp.eq.s32.totalorder 0, 0
  // Predicated region
  $region14: #{softmax_classifier_forward.1} parent=0 // pred_check
    %p40 = pneg %p39
  $region15: #{softmax_classifier_forward.1} parent=0 // pred_check_branch
    %42 = sbr.rel (%p40) target = $region17
  $region16: #{softmax_classifier_forward.1} parent=0 // pred_region
    %v43 = vld [vmem:[%s2] sm:$0x1]
    %v45 = vperm.slane %v43, 0
    %v47 = vadd.f32 %v45, %v36
    %48 = vst [vmem:[%s3] sm:$0xff] %v47
  $region17: #{softmax_classifier_forward.1} parent=0 // pred_fallthru
    _
  %p49 = scmp.gt.s32.totalorder 0, 0
  // Predicated region
  $region18: #{softmax_classifier_forward.1} parent=0 // pred_check
    %p50 = pneg %p49
  $region19: #{softmax_classifier_forward.1} parent=0 // pred_check_branch
    %52 = sbr.rel (%p50) target = $region21
  $region20: #{softmax_classifier_forward.1} parent=0 // pred_region
    %v53 = vld [vmem:[%s3] sm:$0xff]
    %v54 = vadd.f32 %v53, %v36
    %55 = vst [vmem:[%s3] sm:$0xff] %v54
  $region21: #{softmax_classifier_forward.1} parent=0 // pred_fallthru
    _
  // Predicated region
  $region22: #{softmax_classifier_forward.1} parent=0 // pred_check
    _
  $region23: #{softmax_classifier_forward.1} parent=0 // pred_check_branch
    %57 = sbr.rel (0) target = $region25
  $region24: #{softmax_classifier_forward.1} parent=0 // pred_region
    _
  $region25: #{softmax_classifier_forward.1} parent=0 // pred_fallthru
    _
  // Predicated region
  $region26: #{softmax_classifier_forward.1} parent=0 // pred_check
    _
  $region27: #{softmax_classifier_forward.1} parent=0 // pred_check_branch
    %59 = sbr.rel (0) target = $region29
  $region28: #{softmax_classifier_forward.1} parent=0 // pred_region
    _
  $region29: #{softmax_classifier_forward.1} parent=0 // pred_fallthru
    _

</llo_original>
